<compile_context>
chip_gen: v6e
topology: v6e:2x2x1
jax: 0.10.0
libtpu: 0.0.40
codegen_flags: <defaults>
</compile_context>

<pallas_src>
import math

import jax
import jax.numpy as jnp
from jax.experimental import pallas as pl
from jax.experimental.pallas import tpu as pltpu

_LANES = 128           # vreg lane width
_SUBLANES = 8          # f32 sublane granularity
_MAX_TILE_ROWS = 1024  # 1024 x 128 x 4 B = 512 KiB per output tile


def _cdiv(a, b):
    return -(-a // b)


def _round_up(a, m):
    return _cdiv(a, m) * m


def _fill_kernel(param_ref, o_ref):
    # param_ref: (1, 1) scalar in SMEM; o_ref: (tile_rows, 128) tile in VMEM.
    o_ref[...] = jnp.full(o_ref.shape, param_ref[0, 0], dtype=o_ref.dtype)


class KDOutputModelPallas:
    """JAX/Pallas port of KDOutputModel.

    __init__(target_shapes): stores the shapes and a scalar parameter == 1.0.
    forward(*args, **kwargs): ignores inputs, returns
        [ones(shape) * mock_param for shape in target_shapes].
    """

    def __init__(self, target_shapes):
        self.target_shapes = [tuple(int(d) for d in s) for s in target_shapes]
        # torch.nn.Parameter(torch.ones([1]))
        self.mock_param = jnp.ones((1,), dtype=jnp.float32)

        self._numels = [int(math.prod(s)) for s in self.target_shapes]
        max_numel = max(self._numels) if self._numels else 1

        # Lane-dense slab: [padded_rows, 128] covers the largest target.
        rows = max(1, _cdiv(max_numel, _LANES))
        self._tile_rows = min(_MAX_TILE_ROWS, _round_up(rows, _SUBLANES))
        self._padded_rows = _round_up(rows, self._tile_rows)
        grid_steps = self._padded_rows // self._tile_rows

        # Precompute the SMEM view of the parameter and the pallas callable
        # once (static shapes) instead of rebuilding them every forward call.
        self._mock_param_2d = self.mock_param.reshape(1, 1)
        self._fill = pl.pallas_call(
            _fill_kernel,
            out_shape=jax.ShapeDtypeStruct((self._padded_rows, _LANES), jnp.float32),
            grid=(grid_steps,),
            in_specs=[pl.BlockSpec(memory_space=pltpu.MemorySpace.SMEM)],
            out_specs=pl.BlockSpec((self._tile_rows, _LANES), lambda i: (i, 0)),
            compiler_params=pltpu.CompilerParams(
                dimension_semantics=("parallel",),
                vmem_limit_bytes=32 * 1024 * 1024,
            ),
        )

    def forward(self, *args, **kwargs):
        del args, kwargs  # KDOutputModel.forward ignores its inputs.
        if not self.target_shapes:
            return []
        # One kernel launch fills the lane-dense slab with mock_param; every
        # target tensor is a metadata-cheap slice + reshape of that slab.
        slab = self._fill(self._mock_param_2d)
        flat = slab.reshape(-1)
        return [
            flat[:numel].reshape(shape)
            for shape, numel in zip(self.target_shapes, self._numels)
        ]


if __name__ == "__main__":
    key = jax.random.PRNGKey(0)
    # The module ignores its inputs; build a deterministic one anyway.
    x = jax.random.normal(key, (2, 4, 16, 16), dtype=jnp.float32)

    # Small target shapes of mixed rank, consistent with the KD test usage.
    target_shapes = [(2, 4, 16, 16), (2, 4, 256), (2, 1024), (2048,)]
    model = KDOutputModelPallas(target_shapes)

    outs = model.forward(x)
    outs = jax.block_until_ready(outs)

    assert len(outs) == len(target_shapes)
    for out, shape in zip(outs, target_shapes):
        assert out.shape == tuple(shape), (out.shape, shape)
        assert out.dtype == jnp.float32
        ref = jnp.ones(shape, dtype=jnp.float32) * model.mock_param
        assert jnp.allclose(out, ref, atol=0.0, rtol=0.0)

    print("KERNEL_OK")
</pallas_src>

<mosaic_0001>
module attributes {stable_mosaic.version = 11 : i64} {
  func.func @_fill_kernel(%arg0: i32, %arg1: memref<1x1xf32, #tpu.memory_space<smem>>, %arg2: memref<16x128xf32, #tpu.memory_space<vmem>>) attributes {dimension_semantics = [#tpu.dimension_semantics<parallel>], iteration_bounds = array<i64: 1>, scalar_prefetch = 0 : i64, scratch_operands = 0 : i64, tpu.core_type = #tpu.core_type<tc>, window_params = [{transform_indices = @transform_0, window_bounds = array<i64: 1, 1>}, {transform_indices = @transform_1, window_bounds = array<i64: 16, 128>}]} {
    %c0 = arith.constant 0 : index
    %c0_0 = arith.constant 0 : index
    %0 = memref.load %arg1[%c0, %c0_0] : memref<1x1xf32, #tpu.memory_space<smem>>
    %1 = vector.broadcast %0 : f32 to vector<16x128xf32>
    %c0_1 = arith.constant 0 : index
    %c0_2 = arith.constant 0 : index
    %2 = vector.load %arg2[%c0_1, %c0_2] : memref<16x128xf32, #tpu.memory_space<vmem>>, vector<16x128xf32>
    tpu.vector_store %arg2[%c0_1, %c0_2], %1 {strides = array<i32>} : memref<16x128xf32, #tpu.memory_space<vmem>>, vector<16x128xf32>,
    return
  }
  func.func @transform_0(%arg0: i32) -> (i32, i32) {
    %c0_i32 = arith.constant 0 : i32
    %c0_i32_0 = arith.constant 0 : i32
    %c0_i32_1 = arith.constant 0 : i32
    return %c0_i32, %c0_i32_0 : i32, i32
  }
  func.func @transform_1(%arg0: i32) -> (i32, i32) {
    %c0_i32 = arith.constant 0 : i32
    %c0_i32_0 = arith.constant 0 : i32
    return %arg0, %c0_i32 : i32, i32
  }
}

</mosaic_0001>

<llo_original>
// kernel: tpu_custom_call.1
$region0: #{tpu_custom_call.1}
  #allocation0 [shape = 'u32[]', space=smem, size = 0x4, offset = 0x4, fixed_abs, tag = 'smem constant byte address 0x4 - core index']
  #allocation1 [shape = 'u32[144,128]{1,0:T(1,128)}', space=vmem, size = 0x12000, scoped, tag = 'internal scratch']
  #allocation2 [shape = 'f32[1,1]{1,0:T(1,128)S(6)}', space=smem, size = 0x200, scoped, tag = 'scoped memory for tpu_custom_call.1']
  %s0 = inlined_call_operand.<no memory space> [shape: f32[1,1], index: 0, kind: input, shape index: {}]
  %s1 = inlined_call_operand.hbm [shape: f32[16,128], index: 1, kind: output, shape index: {}]
  %s2 = sld [smem:[#allocation0]]
  $region14: #{tpu_custom_call.1} parent=0
    _
  %s4 = ssub.s32 1, %s2
  %s5 = scalar_select 0, %s4, %s2
  %6 = sst [smem:[#allocation2]] %s0
  $region1: #{tpu_custom_call.1} parent=0
    #allocation3 [shape = 'u8[8192]{0}', space=vmem, size = 0x2000, scoped, tag = 'output window, operand 0, single buffered']
    #allocation4 [shape = 's32[1]{0}', space=sflag, size = 0x4, scoped, tag = 'scoped memory for tpu_custom_call.1']
    %7 = vsyncpa [#allocation4], 0
    // Predicated region
    $region2: #{tpu_custom_call.1} parent=1 // pred_check
      _
    $region3: #{tpu_custom_call.1} parent=1 // pred_check_branch
      %9 = sbr.rel (0) target = $region5
    $region4: #{tpu_custom_call.1} parent=1 // pred_region
      _
    $region5: #{tpu_custom_call.1} parent=1 // pred_fallthru
      _
    %s10 = sld [smem:[#allocation2]]
    %v11 = vstv %s10
    %12 = vst [vmem:[#allocation3] sm:$0xff] %v11
    %13 = vst [vmem:[#allocation3 + $0x8] sm:$0xff] %v11
    // Predicated region
    $region6: #{tpu_custom_call.1} parent=1 // pred_check
      _
    $region7: #{tpu_custom_call.1} parent=1 // pred_check_branch
      %15 = sbr.rel (0) target = $region9
    $region8: #{tpu_custom_call.1} parent=1 // pred_region
      %s17 = ssub.s32 256, 256
      %18 = vsyncadd [#allocation4], %s17
      %s19 = sshll.u32 [#allocation3], 4
      %s20 = int_to_ptr.vmem [resolvable:$true] %s19
      %25 = dma.vmem_to_hbm [thread:$0]  %s20, 256, %s1, [#allocation4], 128, 128, 8
    $region9: #{tpu_custom_call.1} parent=1 // pred_fallthru
      _
    // Predicated region
    $region10: #{tpu_custom_call.1} parent=1 // pred_check
      _
    $region11: #{tpu_custom_call.1} parent=1 // pred_check_branch
      %27 = sbr.rel (0) target = $region13
    $region12: #{tpu_custom_call.1} parent=1 // pred_region
      %28 = dma.done [#allocation4], 256
    $region13: #{tpu_custom_call.1} parent=1 // pred_fallthru
      _
    %29 = vsyncpa [#allocation4], 1

</llo_original>
